<compile_context>
chip_gen: v6e
topology: v6e:2x2x1
jax: 0.10.0
libtpu: 0.0.40
codegen_flags: <defaults>
</compile_context>

<pallas_src>
import numpy as np
import jax
import jax.numpy as jnp
from jax.experimental import pallas as pl
from jax.experimental.pallas import tpu as pltpu

LANE = 128


def _round_up(n, m):
    return ((n + m - 1) // m) * m


# ---------------------------------------------------------------------------
# Pallas kernel: per-tile y = sum_d X[r, d] * w[d]
# ---------------------------------------------------------------------------
def _wreath_forward_kernel(w_ref, x_ref, o_ref):
    # w_ref: (1, Dp)  f32, VMEM-resident across the whole batch grid.
    # x_ref: (TM, Dp) f32 batch tile.
    # o_ref: (TM, 1)  f32 per-row dot products.
    # VPU broadcast-multiply (w row broadcast over sublanes) + XLU lane reduce;
    # avoids burning the MXU on an N=1 matmul. Exact f32 math.
    prod = x_ref[...] * w_ref[...]                       # (TM, Dp)
    o_ref[...] = jnp.sum(prod, axis=-1, keepdims=True)   # (TM, 1)


def wreath_forward(x, w, *, tm=1024):
    """y = x @ w.  x: [B, D] f32, w: [D, 1] f32  ->  [B, 1] f32.

    Pads D up to a multiple of 128 lanes and B up to a multiple of the row
    tile TM (no-ops if the caller already padded, as WreathPolicyJAX does),
    then runs a 1-D batch-tiled Pallas kernel with W resident in VMEM.
    """
    x = jnp.asarray(x, jnp.float32)
    w = jnp.asarray(w, jnp.float32)
    B, D = x.shape
    assert w.shape == (D, 1), (w.shape, D)

    d_pad = _round_up(D, LANE)
    # Row tile: multiple of 128, clamped to the (padded) batch size.
    tm = max(LANE, (min(int(tm), _round_up(B, LANE)) // LANE) * LANE)
    b_pad = _round_up(B, tm)

    if b_pad != B or d_pad != D:
        x = jnp.pad(x, ((0, b_pad - B), (0, d_pad - D)))
    if d_pad != D:
        w = jnp.pad(w, ((0, d_pad - D), (0, 0)))
    w_row = w.reshape(1, d_pad)  # (1, Dp): feature dim on lanes

    grid = (b_pad // tm,)

    y = pl.pallas_call(
        _wreath_forward_kernel,
        out_shape=jax.ShapeDtypeStruct((b_pad, 1), jnp.float32),
        grid_spec=pltpu.PrefetchScalarGridSpec(
            num_scalar_prefetch=0,
            grid=grid,
            in_specs=[
                # W row: constant block index -> stays VMEM-resident.
                pl.BlockSpec((1, d_pad), lambda i: (0, 0)),
                # X: one (TM, Dp) batch tile per grid step.
                pl.BlockSpec((tm, d_pad), lambda i: (i, 0)),
            ],
            out_specs=pl.BlockSpec((tm, 1), lambda i: (i, 0)),
        ),
        compiler_params=pltpu.CompilerParams(
            # Batch tiles are independent -> shard across TensorCores (v7x: 2 TCs).
            dimension_semantics=("parallel",),
            vmem_limit_bytes=32 * 1024 * 1024,
        ),
        cost_estimate=pl.CostEstimate(
            flops=2 * b_pad * d_pad,
            transcendentals=0,
            bytes_accessed=(b_pad * d_pad + d_pad + b_pad) * 4,
        ),
    )(w_row, x)
    return y[:B]


# ---------------------------------------------------------------------------
# Synthetic "WreathPolicy" (glue in plain JAX / numpy; no data files)
# ---------------------------------------------------------------------------
class WreathPolicyJAX:
    """Mirrors WreathPolicy: w of shape (get_dim()+1, 1); forward = matmul.

    Feature width is zero-padded to a full 128-lane multiple at construction
    time (perf feedback): make_batch emits [B, d_pad] tensors with zero tail
    columns, and w_pad holds matching zero tail rows, so results are identical
    to the unpadded matmul.
    """

    def __init__(self, irrep_dims, key):
        self.irrep_dims = tuple(irrep_dims)
        self.dim = sum(d * d for d in self.irrep_dims)          # get_dim()
        self.d_pad = _round_up(self.dim + 1, LANE)
        # w_torch = nn.Parameter(torch.rand(dim + 1, 1)) -> uniform [0, 1)
        self.w = jax.random.uniform(
            key, (self.dim + 1, 1), dtype=jnp.float32, minval=0.0, maxval=1.0
        )
        self.w_pad = jnp.pad(self.w, ((0, self.d_pad - (self.dim + 1)), (0, 0)))
        self.nout = 1
        self._fwd = jax.jit(wreath_forward, static_argnames=("tm",))

    def to_irrep(self, rep_mats):
        """Emulates WreathPolicy.to_irrep for one permutation's rep matrices."""
        pieces = [rep.reshape(1, -1) * np.sqrt(rep.shape[0]) for rep in rep_mats]
        pieces.append(np.array([[1.0]]))
        return np.hstack(pieces).astype(np.float32)

    def make_batch(self, key, batch):
        """Builds a [B, d_pad] tensor like to_tensor() would (vectorized,
        deterministic synthetic irrep matrices; zero-padded tail columns)."""
        pieces = []
        for i, d in enumerate(self.irrep_dims):
            sub = jax.random.normal(
                jax.random.fold_in(key, i), (batch, d, d), dtype=jnp.float32
            )
            pieces.append((sub * np.sqrt(d)).reshape(batch, d * d))
        pieces.append(jnp.ones((batch, 1), jnp.float32))            # trailing [[1]]
        tail = self.d_pad - (self.dim + 1)
        if tail > 0:
            pieces.append(jnp.zeros((batch, tail), jnp.float32))    # lane padding
        return jnp.concatenate(pieces, axis=1)

    def forward(self, tensor, *, tm=1024):
        w = self.w_pad if tensor.shape[1] == self.d_pad else self.w
        return self._fwd(tensor, w, tm=tm)


# ---------------------------------------------------------------------------
if __name__ == "__main__":
    key = jax.random.PRNGKey(0)
    k_w, k_x = jax.random.split(key)

    # Irrep matrix dims 4 and 7 -> get_dim() = 16 + 49 = 65, D = 66 -> padded 128.
    policy = WreathPolicyJAX(irrep_dims=(4, 7), key=k_w)

    # Large-enough stacked batch to amortize launch cost and exercise the
    # batch grid (grid = 4 tiles of 256 rows), while staying small overall.
    batch = 1024
    x = policy.make_batch(k_x, batch)            # [1024, 128] f32 (zero tail cols)

    y = policy.forward(x, tm=256)                # [1024, 1] f32 via Pallas kernel
    y = jax.block_until_ready(y)
    assert y.shape == (batch, 1)

    # Reference: exact float64 matmul on host.
    x64 = np.asarray(x, dtype=np.float64)
    w64 = np.asarray(policy.w_pad, dtype=np.float64)
    y_ref = (x64 @ w64).astype(np.float32)
    np.testing.assert_allclose(np.asarray(y), y_ref, rtol=1e-4, atol=1e-4)

    print("KERNEL_OK")
</pallas_src>

<mosaic_0001>
module attributes {stable_mosaic.version = 11 : i64} {
  func.func @_wreath_forward_kernel(%arg0: i32, %arg1: memref<1x128xf32, #tpu.memory_space<vmem>>, %arg2: memref<256x128xf32, #tpu.memory_space<vmem>>, %arg3: memref<256x1xf32, #tpu.memory_space<vmem>>) attributes {dimension_semantics = [#tpu.dimension_semantics<parallel>], iteration_bounds = array<i64: 4>, scalar_prefetch = 0 : i64, scratch_operands = 0 : i64, tpu.core_type = #tpu.core_type<tc>, window_params = [{pipeline_mode = #tpu.pipeline_mode<synchronous>, transform_indices = @transform_0, window_bounds = array<i64: 1, 128>}, {transform_indices = @transform_1, window_bounds = array<i64: 256, 128>}, {transform_indices = @transform_2, window_bounds = array<i64: 256, 1>}]} {
    %c0 = arith.constant 0 : index
    %c0_0 = arith.constant 0 : index
    %0 = vector.load %arg2[%c0, %c0_0] : memref<256x128xf32, #tpu.memory_space<vmem>>, vector<256x128xf32>
    %c0_1 = arith.constant 0 : index
    %c0_2 = arith.constant 0 : index
    %1 = vector.load %arg1[%c0_1, %c0_2] : memref<1x128xf32, #tpu.memory_space<vmem>>, vector<1x128xf32>
    %2 = vector.broadcast %1 : vector<1x128xf32> to vector<256x128xf32>
    %3 = arith.mulf %0, %2 : vector<256x128xf32>
    %cst = arith.constant dense<0.000000e+00> : vector<256xf32>
    %4 = vector.multi_reduction <add>, %3, %cst [1] : vector<256x128xf32> to vector<256xf32>
    %5 = vector.shape_cast %4 : vector<256xf32> to vector<256x1xf32>
    %c0_3 = arith.constant 0 : index
    %c0_4 = arith.constant 0 : index
    %6 = vector.load %arg3[%c0_3, %c0_4] : memref<256x1xf32, #tpu.memory_space<vmem>>, vector<256x1xf32>
    tpu.vector_store %arg3[%c0_3, %c0_4], %5 {strides = array<i32>} : memref<256x1xf32, #tpu.memory_space<vmem>>, vector<256x1xf32>,
    return
  }
  func.func @transform_0(%arg0: i32) -> (i32, i32) {
    %c0_i32 = arith.constant 0 : i32
    %c0_i32_0 = arith.constant 0 : i32
    %c0_i32_1 = arith.constant 0 : i32
    return %c0_i32, %c0_i32_0 : i32, i32
  }
  func.func @transform_1(%arg0: i32) -> (i32, i32) {
    %c0_i32 = arith.constant 0 : i32
    %c0_i32_0 = arith.constant 0 : i32
    return %arg0, %c0_i32 : i32, i32
  }
  func.func @transform_2(%arg0: i32) -> (i32, i32) {
    %c0_i32 = arith.constant 0 : i32
    %c0_i32_0 = arith.constant 0 : i32
    return %arg0, %c0_i32 : i32, i32
  }
}

</mosaic_0001>

<llo_original>
// kernel: wreath_forward.1
$region0: #{wreath_forward.1}
  #allocation0 [shape = 'u32[]', space=smem, size = 0x4, offset = 0x4, fixed_abs, tag = 'smem constant byte address 0x4 - core index']
  #allocation1 [shape = 'u32[144,128]{1,0:T(1,128)}', space=vmem, size = 0x12000, scoped, tag = 'internal scratch']
  %s0 = inlined_call_operand.vmem [shape: f32[1,128], index: 0, kind: input, shape index: {}]
  %s1 = inlined_call_operand.hbm [shape: f32[1024,128], index: 1, kind: input, shape index: {}]
  %s2 = inlined_call_operand.vmem [shape: f32[1024,1], index: 2, kind: output, shape index: {}]
  %s3 = sld [smem:[#allocation0]]
  $region45: #{wreath_forward.1} parent=0
    _
  %s5 = ssub.s32 1, %s3
  %s6 = scalar_select 0, %s5, %s3
  $region1: #{wreath_forward.1} parent=0
    #allocation2 [shape = 'u8[262144]{0}', space=vmem, size = 0x40000, scoped, tag = 'input window, operand 1']
    #allocation3 [shape = 's32[2]{0}', space=sflag, size = 0x8, scoped, tag = 'scoped memory for wreath_forward.1']
    %7 = vsyncpa [#allocation3], 0
    %s8 = scalar_lea.sflag [#allocation3], 1
    %9 = vsyncpa %s8, 0
    loop: start=0, step=1, limit=6
    $region2: #{wreath_forward.1} parent=1 // loop_pre_header
      _
    $region3: #{wreath_forward.1} parent=1 // loop_header
      %s11 = sphi 0, %s15
      %p12 = scmp.ge.s32.totalorder %s11, 6
      %s19 = sphi 0, %s19
      %s21 = sphi 0, %s19
      %s22 = sphi 0, %s21
      %s36 = sphi 0, %s22
      %s42 = sphi 0, %s44
      %s45 = sphi 0, %s42
      %s46 = sphi 0, %s45
      %s62 = sphi 0, %s46
      %s68 = sphi 0, %s70
      %s71 = sphi 0, %s68
      %s72 = sphi 0, %s71
      %s88 = sphi 0, %s72
    $region4: #{wreath_forward.1} parent=1 // loop_header_branch
      %14 = sbr.rel (%p12) target = $region8
    $region5: #{wreath_forward.1} parent=1 // loop_body
      %s16 = ssub.s32 %s11, 1
      %s17 = ssub.s32 %s11, 2
      %s18 = sadd.s32 %s11, 1
      %s20 = sadd.s32 %s19, 1
      %p23 = scmp.eq.s32.totalorder %s11, 3
      %p24 = scmp.ne.s32.totalorder %s19, %s21
      %p25 = scmp.eq.s32.totalorder %s11, 0
      %p26 = por %p24, %p25
      %p27 = scmp.ne.s32.totalorder %s19, %s21
      %p28 = scmp.eq.s32.totalorder %s16, 3
      %p29 = por %p27, %p28
      %p30 = scmp.ne.s32.totalorder %s21, %s22
      %p31 = scmp.eq.s32.totalorder %s16, 0
      %p32 = por %p30, %p31
      %p33 = scmp.ne.s32.totalorder %s21, %s22
      %p34 = scmp.eq.s32.totalorder %s17, 3
      %p35 = por %p33, %p34
      %p37 = scmp.ne.s32.totalorder %s22, %s36
      %p38 = scmp.eq.s32.totalorder %s17, 0
      %p39 = por %p37, %p38
      %s40 = ssub.s32 %s11, %s18
      %p41 = scmp.eq.s32.totalorder %s40, 0
      %s43 = sadd.s32 %s42, 1
      %s44 = scalar_select %p41, %s42, %s43
      %p47 = pneg %p41
      %p48 = scmp.eq.s32.totalorder %s11, 3
      %p49 = por %p47, %p48
      %p50 = scmp.ne.s32.totalorder %s42, %s45
      %p51 = scmp.eq.s32.totalorder %s11, 0
      %p52 = por %p50, %p51
      %p53 = scmp.ne.s32.totalorder %s42, %s45
      %p54 = scmp.eq.s32.totalorder %s16, 3
      %p55 = por %p53, %p54
      %p56 = scmp.ne.s32.totalorder %s45, %s46
      %p57 = scmp.eq.s32.totalorder %s16, 0
      %p58 = por %p56, %p57
      %p59 = scmp.ne.s32.totalorder %s45, %s46
      %p60 = scmp.eq.s32.totalorder %s17, 3
      %p61 = por %p59, %p60
      %p63 = scmp.ne.s32.totalorder %s46, %s62
      %p64 = scmp.eq.s32.totalorder %s17, 0
      %p65 = por %p63, %p64
      %s66 = ssub.s32 %s11, %s18
      %p67 = scmp.eq.s32.totalorder %s66, 0
      %s69 = sadd.s32 %s68, 1
      %s70 = scalar_select %p67, %s68, %s69
      %p73 = pneg %p67
      %p74 = scmp.eq.s32.totalorder %s11, 3
      %p75 = por %p73, %p74
      %p76 = scmp.ne.s32.totalorder %s68, %s71
      %p77 = scmp.eq.s32.totalorder %s11, 0
      %p78 = por %p76, %p77
      %p79 = scmp.ne.s32.totalorder %s68, %s71
      %p80 = scmp.eq.s32.totalorder %s16, 3
      %p81 = por %p79, %p80
      %p82 = scmp.ne.s32.totalorder %s71, %s72
      %p83 = scmp.eq.s32.totalorder %s16, 0
      %p84 = por %p82, %p83
      %p85 = scmp.ne.s32.totalorder %s71, %s72
      %p86 = scmp.eq.s32.totalorder %s17, 3
      %p87 = por %p85, %p86
      %p89 = scmp.ne.s32.totalorder %s72, %s88
      %p90 = scmp.eq.s32.totalorder %s17, 0
      %p91 = por %p89, %p90
      %p92 = scmp.le.s32.totalorder 1, %s11
      %p93 = scmp.lt.s32.totalorder %s11, 5
      %p94 = pnand %p92, %p93
      %p95 = pneg %p94
      // Predicated region
      $region9: #{wreath_forward.1} parent=5 // pred_check
        _
      $region10: #{wreath_forward.1} parent=5 // pred_check_branch
        %97 = sbr.rel (%p94) target = $region12
      $region11: #{wreath_forward.1} parent=5 // pred_region
        %s98 = ssub.s32 %s11, 1
        // Predicated region
        $region13: #{wreath_forward.1} parent=11 // pred_check
          %p99 = pneg %p32
        $region14: #{wreath_forward.1} parent=11 // pred_check_branch
          %101 = sbr.rel (%p99) target = $region16
        $region15: #{wreath_forward.1} parent=11 // pred_region
          _
        $region16: #{wreath_forward.1} parent=11 // pred_fallthru
          _
      $region12: #{wreath_forward.1} parent=5 // pred_fallthru
        _
      %p102 = scmp.lt.s32.totalorder %s11, 4
      // Predicated region
      $region17: #{wreath_forward.1} parent=5 // pred_check
        %p103 = pneg %p102
      $region18: #{wreath_forward.1} parent=5 // pred_check_branch
        %105 = sbr.rel (%p103) target = $region20
      $region19: #{wreath_forward.1} parent=5 // pred_region
        // Predicated region
        $region21: #{wreath_forward.1} parent=19 // pred_check
          %p106 = pneg %p52
        $region22: #{wreath_forward.1} parent=19 // pred_check_branch
          %108 = sbr.rel (%p106) target = $region24
        $region23: #{wreath_forward.1} parent=19 // pred_region
          %s109 = sand.u32 %s42, 1
          %s110 = scalar_lea.sflag [#allocation3], %s109
          %s111 = sand.u32 %s42, 1
          %s112 = smul.addr %s111, 256
          %s113 = scalar_lea.vmem [#allocation2], %s112
          %s114 = smul.u32 32, %s11
          %s116 = ssub.s32 4096, 4096
          %117 = vsyncadd %s110, %s116
          %s118 = smul.addr %s114, 128
          %s119 = scalar_lea.hbm %s1, %s118
          %s120 = sshll.u32 %s113, 4
          %s121 = int_to_ptr.vmem [resolvable:$true] %s120
          %126 = dma.hbm_to_vmem [thread:$0]  %s119, 4096, %s121, %s110, 128, 128, 8
        $region24: #{wreath_forward.1} parent=19 // pred_fallthru
          _
      $region20: #{wreath_forward.1} parent=5 // pred_fallthru
        _
      %p127 = scmp.le.s32.totalorder 1, %s11
      %p128 = scmp.lt.s32.totalorder %s11, 5
      %p129 = pnand %p127, %p128
      %p130 = pneg %p129
      // Predicated region
      $region25: #{wreath_forward.1} parent=5 // pred_check
        _
      $region26: #{wreath_forward.1} parent=5 // pred_check_branch
        %132 = sbr.rel (%p129) target = $region28
      $region27: #{wreath_forward.1} parent=5 // pred_region
        %s133 = ssub.s32 %s11, 1
        %s134 = sand.u32 %s45, 1
        %s135 = scalar_lea.sflag [#allocation3], %s134
        %s136 = sand.u32 %s45, 1
        %s137 = smul.addr %s136, 256
        %s138 = scalar_lea.vmem [#allocation2], %s137
        // Predicated region
        $region29: #{wreath_forward.1} parent=27 // pred_check
          %p139 = pneg %p58
        $region30: #{wreath_forward.1} parent=27 // pred_check_branch
          %141 = sbr.rel (%p139) target = $region32
        $region31: #{wreath_forward.1} parent=27 // pred_region
          %142 = dma.done %s135, 4096
        $region32: #{wreath_forward.1} parent=27 // pred_fallthru
          _
        %p143 = pneg %p32
        %p144 = pneg %p29
        %s145 = sand.u32 %s45, 1
        %s146 = scalar_lea.sflag [#allocation3], %s145
        %s147 = sand.u32 %s45, 1
        %s148 = smul.addr %s147, 256
        %s149 = scalar_lea.vmem [#allocation2], %s148
        %p150 = pneg %p58
        %p151 = pneg %p55
        %p152 = pneg %p84
        %p153 = pneg %p81
        %s154 = smul.u32 32, %s16
        %p155 = scmp.lt.s32.totalorder %s154, 127
        %s156 = scalar_select %p155, %s154, 127
        %s157 = smul.addr %s156, 8
        %s158 = scalar_lea.vmem %s2, %s157
        %s159 = smul.u32 32, %s16
        %s160 = smul.u32 32, %s16
        %p161 = scmp.lt.s32.totalorder %s160, 127
        %s162 = scalar_select %p161, %s160, 127
        %s163 = smul.addr %s162, 8
        %s164 = scalar_lea.vmem %s2, %s163
        %s165 = smul.u32 32, %s16
        %v166 = vld [vmem:[%s138] sm:$0xff]
        %v167 = vld [vmem:[%s138 + $0x8] sm:$0xff]
        %v168 = vld [vmem:[%s138 + $0x10] sm:$0xff]
        %v169 = vld [vmem:[%s138 + $0x18] sm:$0xff]
        %v170 = vld [vmem:[%s138 + $0x20] sm:$0xff]
        %v171 = vld [vmem:[%s138 + $0x28] sm:$0xff]
        %v172 = vld [vmem:[%s138 + $0x30] sm:$0xff]
        %v173 = vld [vmem:[%s138 + $0x38] sm:$0xff]
        %v174 = vld [vmem:[%s138 + $0x40] sm:$0xff]
        %v175 = vld [vmem:[%s138 + $0x48] sm:$0xff]
        %v176 = vld [vmem:[%s138 + $0x50] sm:$0xff]
        %v177 = vld [vmem:[%s138 + $0x58] sm:$0xff]
        %v178 = vld [vmem:[%s138 + $0x60] sm:$0xff]
        %v179 = vld [vmem:[%s138 + $0x68] sm:$0xff]
        %v180 = vld [vmem:[%s138 + $0x70] sm:$0xff]
        %v181 = vld [vmem:[%s138 + $0x78] sm:$0xff]
        %v182 = vld [vmem:[%s138 + $0x80] sm:$0xff]
        %v183 = vld [vmem:[%s138 + $0x88] sm:$0xff]
        %v184 = vld [vmem:[%s138 + $0x90] sm:$0xff]
        %v185 = vld [vmem:[%s138 + $0x98] sm:$0xff]
        %v186 = vld [vmem:[%s138 + $0xa0] sm:$0xff]
        %v187 = vld [vmem:[%s138 + $0xa8] sm:$0xff]
        %v188 = vld [vmem:[%s138 + $0xb0] sm:$0xff]
        %v189 = vld [vmem:[%s138 + $0xb8] sm:$0xff]
        %v190 = vld [vmem:[%s138 + $0xc0] sm:$0xff]
        %v191 = vld [vmem:[%s138 + $0xc8] sm:$0xff]
        %v192 = vld [vmem:[%s138 + $0xd0] sm:$0xff]
        %v193 = vld [vmem:[%s138 + $0xd8] sm:$0xff]
        %v194 = vld [vmem:[%s138 + $0xe0] sm:$0xff]
        %v195 = vld [vmem:[%s138 + $0xe8] sm:$0xff]
        %v196 = vld [vmem:[%s138 + $0xf0] sm:$0xff]
        %v197 = vld [vmem:[%s138 + $0xf8] sm:$0xff]
        %v198 = vld [vmem:[%s0] sm:$0x1]
        %v200 = vlaneseq
        %v201 = vshrl.u32 %v200, 7
        %v202 = vsub.s32 0, %v201
        %v203 = vrot.slane %v198, %v202
        %v205 = vmul.f32 %v166, %v203
        %v206 = vmul.f32 %v167, %v203
        %v207 = vmul.f32 %v168, %v203
        %v208 = vmul.f32 %v169, %v203
        %v209 = vmul.f32 %v170, %v203
        %v210 = vmul.f32 %v171, %v203
        %v211 = vmul.f32 %v172, %v203
        %v212 = vmul.f32 %v173, %v203
        %v213 = vmul.f32 %v174, %v203
        %v214 = vmul.f32 %v175, %v203
        %v215 = vmul.f32 %v176, %v203
        %v216 = vmul.f32 %v177, %v203
        %v217 = vmul.f32 %v178, %v203
        %v218 = vmul.f32 %v179, %v203
        %v219 = vmul.f32 %v180, %v203
        %v220 = vmul.f32 %v181, %v203
        %v221 = vmul.f32 %v182, %v203
        %v222 = vmul.f32 %v183, %v203
        %v223 = vmul.f32 %v184, %v203
        %v224 = vmul.f32 %v185, %v203
        %v225 = vmul.f32 %v186, %v203
        %v226 = vmul.f32 %v187, %v203
        %v227 = vmul.f32 %v188, %v203
        %v228 = vmul.f32 %v189, %v203
        %v229 = vmul.f32 %v190, %v203
        %v230 = vmul.f32 %v191, %v203
        %v231 = vmul.f32 %v192, %v203
        %v232 = vmul.f32 %v193, %v203
        %v233 = vmul.f32 %v194, %v203
        %v234 = vmul.f32 %v195, %v203
        %v235 = vmul.f32 %v196, %v203
        %v236 = vmul.f32 %v197, %v203
        %237 = vadd.xlane.f32.xlu0 %v205
        %v238 = vpop.xlane.xlu0 %237
        %239 = vadd.xlane.f32.xlu0 %v206
        %v240 = vpop.xlane.xlu0 %239
        %241 = vadd.xlane.f32.xlu0 %v207
        %v242 = vpop.xlane.xlu0 %241
        %243 = vadd.xlane.f32.xlu0 %v208
        %v244 = vpop.xlane.xlu0 %243
        %245 = vadd.xlane.f32.xlu0 %v209
        %v246 = vpop.xlane.xlu0 %245
        %247 = vadd.xlane.f32.xlu0 %v210
        %v248 = vpop.xlane.xlu0 %247
        %249 = vadd.xlane.f32.xlu0 %v211
        %v250 = vpop.xlane.xlu0 %249
        %251 = vadd.xlane.f32.xlu0 %v212
        %v252 = vpop.xlane.xlu0 %251
        %253 = vadd.xlane.f32.xlu0 %v213
        %v254 = vpop.xlane.xlu0 %253
        %255 = vadd.xlane.f32.xlu0 %v214
        %v256 = vpop.xlane.xlu0 %255
        %257 = vadd.xlane.f32.xlu0 %v215
        %v258 = vpop.xlane.xlu0 %257
        %259 = vadd.xlane.f32.xlu0 %v216
        %v260 = vpop.xlane.xlu0 %259
        %261 = vadd.xlane.f32.xlu0 %v217
        %v262 = vpop.xlane.xlu0 %261
        %263 = vadd.xlane.f32.xlu0 %v218
        %v264 = vpop.xlane.xlu0 %263
        %265 = vadd.xlane.f32.xlu0 %v219
        %v266 = vpop.xlane.xlu0 %265
        %267 = vadd.xlane.f32.xlu0 %v220
        %v268 = vpop.xlane.xlu0 %267
        %269 = vadd.xlane.f32.xlu0 %v221
        %v270 = vpop.xlane.xlu0 %269
        %271 = vadd.xlane.f32.xlu0 %v222
        %v272 = vpop.xlane.xlu0 %271
        %273 = vadd.xlane.f32.xlu0 %v223
        %v274 = vpop.xlane.xlu0 %273
        %275 = vadd.xlane.f32.xlu0 %v224
        %v276 = vpop.xlane.xlu0 %275
        %277 = vadd.xlane.f32.xlu0 %v225
        %v278 = vpop.xlane.xlu0 %277
        %279 = vadd.xlane.f32.xlu0 %v226
        %v280 = vpop.xlane.xlu0 %279
        %281 = vadd.xlane.f32.xlu0 %v227
        %v282 = vpop.xlane.xlu0 %281
        %283 = vadd.xlane.f32.xlu0 %v228
        %v284 = vpop.xlane.xlu0 %283
        %285 = vadd.xlane.f32.xlu0 %v229
        %v286 = vpop.xlane.xlu0 %285
        %287 = vadd.xlane.f32.xlu0 %v230
        %v288 = vpop.xlane.xlu0 %287
        %289 = vadd.xlane.f32.xlu0 %v231
        %v290 = vpop.xlane.xlu0 %289
        %291 = vadd.xlane.f32.xlu0 %v232
        %v292 = vpop.xlane.xlu0 %291
        %293 = vadd.xlane.f32.xlu0 %v233
        %v294 = vpop.xlane.xlu0 %293
        %295 = vadd.xlane.f32.xlu0 %v234
        %v296 = vpop.xlane.xlu0 %295
        %297 = vadd.xlane.f32.xlu0 %v235
        %v298 = vpop.xlane.xlu0 %297
        %299 = vadd.xlane.f32.xlu0 %v236
        %v300 = vpop.xlane.xlu0 %299
        %vm301 = vcmask 7168
        %302 = vst.msk [vmem:[%s164] sm:$0xff] %vm301, %v238
        %303 = vst.msk [vmem:[%s164 + $0x8] sm:$0xff] %vm301, %v240
        %304 = vst.msk [vmem:[%s164 + $0x10] sm:$0xff] %vm301, %v242
        %305 = vst.msk [vmem:[%s164 + $0x18] sm:$0xff] %vm301, %v244
        %306 = vst.msk [vmem:[%s164 + $0x20] sm:$0xff] %vm301, %v246
        %307 = vst.msk [vmem:[%s164 + $0x28] sm:$0xff] %vm301, %v248
        %308 = vst.msk [vmem:[%s164 + $0x30] sm:$0xff] %vm301, %v250
        %309 = vst.msk [vmem:[%s164 + $0x38] sm:$0xff] %vm301, %v252
        %310 = vst.msk [vmem:[%s164 + $0x40] sm:$0xff] %vm301, %v254
        %311 = vst.msk [vmem:[%s164 + $0x48] sm:$0xff] %vm301, %v256
        %312 = vst.msk [vmem:[%s164 + $0x50] sm:$0xff] %vm301, %v258
        %313 = vst.msk [vmem:[%s164 + $0x58] sm:$0xff] %vm301, %v260
        %314 = vst.msk [vmem:[%s164 + $0x60] sm:$0xff] %vm301, %v262
        %315 = vst.msk [vmem:[%s164 + $0x68] sm:$0xff] %vm301, %v264
        %316 = vst.msk [vmem:[%s164 + $0x70] sm:$0xff] %vm301, %v266
        %317 = vst.msk [vmem:[%s164 + $0x78] sm:$0xff] %vm301, %v268
        %318 = vst.msk [vmem:[%s164 + $0x80] sm:$0xff] %vm301, %v270
        %319 = vst.msk [vmem:[%s164 + $0x88] sm:$0xff] %vm301, %v272
        %320 = vst.msk [vmem:[%s164 + $0x90] sm:$0xff] %vm301, %v274
        %321 = vst.msk [vmem:[%s164 + $0x98] sm:$0xff] %vm301, %v276
        %322 = vst.msk [vmem:[%s164 + $0xa0] sm:$0xff] %vm301, %v278
        %323 = vst.msk [vmem:[%s164 + $0xa8] sm:$0xff] %vm301, %v280
        %324 = vst.msk [vmem:[%s164 + $0xb0] sm:$0xff] %vm301, %v282
        %325 = vst.msk [vmem:[%s164 + $0xb8] sm:$0xff] %vm301, %v284
        %326 = vst.msk [vmem:[%s164 + $0xc0] sm:$0xff] %vm301, %v286
        %327 = vst.msk [vmem:[%s164 + $0xc8] sm:$0xff] %vm301, %v288
        %328 = vst.msk [vmem:[%s164 + $0xd0] sm:$0xff] %vm301, %v290
        %329 = vst.msk [vmem:[%s164 + $0xd8] sm:$0xff] %vm301, %v292
        %330 = vst.msk [vmem:[%s164 + $0xe0] sm:$0xff] %vm301, %v294
        %331 = vst.msk [vmem:[%s164 + $0xe8] sm:$0xff] %vm301, %v296
        %332 = vst.msk [vmem:[%s164 + $0xf0] sm:$0xff] %vm301, %v298
        %333 = vst.msk [vmem:[%s164 + $0xf8] sm:$0xff] %vm301, %v300
        %s334 = smul.u32 32, %s16
        %p335 = scmp.lt.s32.totalorder %s334, 127
        %s336 = scalar_select %p335, %s334, 127
        %s337 = smul.addr %s336, 8
        %s338 = scalar_lea.vmem %s2, %s337
        // Predicated region
        $region33: #{wreath_forward.1} parent=27 // pred_check
          %p339 = pneg %p81
        $region34: #{wreath_forward.1} parent=27 // pred_check_branch
          %341 = sbr.rel (%p339) target = $region36
        $region35: #{wreath_forward.1} parent=27 // pred_region
          %s342 = smul.u32 32, %s16
        $region36: #{wreath_forward.1} parent=27 // pred_fallthru
          _
      $region28: #{wreath_forward.1} parent=5 // pred_fallthru
        _
      %p343 = scmp.le.s32.totalorder 2, %s11
      // Predicated region
      $region37: #{wreath_forward.1} parent=5 // pred_check
        %p344 = pneg %p343
      $region38: #{wreath_forward.1} parent=5 // pred_check_branch
        %346 = sbr.rel (%p344) target = $region40
      $region39: #{wreath_forward.1} parent=5 // pred_region
        %s347 = ssub.s32 %s11, 2
        // Predicated region
        $region41: #{wreath_forward.1} parent=39 // pred_check
          %p348 = pneg %p87
        $region42: #{wreath_forward.1} parent=39 // pred_check_branch
          %350 = sbr.rel (%p348) target = $region44
        $region43: #{wreath_forward.1} parent=39 // pred_region
          %s351 = smul.u32 32, %s17
          %p352 = scmp.lt.s32.totalorder %s351, 127
          %s353 = scalar_select %p352, %s351, 127
          %s354 = smul.addr %s353, 8
          %s355 = scalar_lea.vmem %s2, %s354
        $region44: #{wreath_forward.1} parent=39 // pred_fallthru
          _
      $region40: #{wreath_forward.1} parent=5 // pred_fallthru
        _
    $region6: #{wreath_forward.1} parent=1 // loop_footer
      %s15 = sadd.s32 1, %s11
    $region7: #{wreath_forward.1} parent=1 // loop_footer_branch
      %10 = sbr.rel target = $region3
    $region8: #{wreath_forward.1} parent=1 // loop_exit
      _
    %356 = vsyncpa [#allocation3], 1
    %s357 = scalar_lea.sflag [#allocation3], 1
    %358 = vsyncpa %s357, 1

</llo_original>
